<compile_context>
chip_gen: v7x
topology: tpu7x:2x2x1
jax: 0.10.0
libtpu: 0.0.40
codegen_flags: <defaults>
</compile_context>

<pallas_src>
import jax
import jax.numpy as jnp
import numpy as np
from jax.experimental import pallas as pl
from jax.experimental.pallas import tpu as pltpu

LANE = 128


def _round_up(x, m):
    return ((x + m - 1) // m) * m


def _tile_vmem_bytes(tn, m, e):
    """Rough per-tile VMEM footprint used to clamp the tile size."""
    e8 = _round_up(e, 8)
    onehot = 2 * m * tn * 4                       # bool mask + f32 one-hot (upper bound)
    io = 2 * (8 * tn * 4) + 2 * (e8 * tn * 4)     # double-buffered pkeys + out tiles
    resident = m * LANE * 4 + e8 * m * 4          # node keys (lane-padded) + embed^T
    return onehot + io + resident


def point_embed_kernel(pkeys_ref, nkeys_ref, embed_t_ref, out_ref):
    # pkeys_ref  : (2, TN)  int32   point keys (row 0 = x, row 1 = y), lane-dense
    # nkeys_ref  : (M, 2)   int32   node keys (VMEM-resident, constant index_map)
    # embed_t_ref: (E, M)   float32 embedding weight, transposed (VMEM-resident)
    # out_ref    : (E, TN)  float32 lane-dense output tile (full-width stores)
    px = pkeys_ref[0:1, :]          # (1, TN)
    py = pkeys_ref[1:2, :]          # (1, TN)
    nx = nkeys_ref[:, 0:1]          # (M, 1)
    ny = nkeys_ref[:, 1:2]          # (M, 1)

    # onehot[m, t] = (nodes[m] == points[t])  -- exact integer compare.
    match = jnp.logical_and(nx == px, ny == py)        # (M, TN) bool
    onehot = match.astype(jnp.float32)                  # exact 0/1

    # Embedding gather as a one-hot matmul on the MXU: (E, M) @ (M, TN).
    # The 0/1 RHS makes the default-precision f32 matmul exact.
    out_ref[...] = jnp.dot(
        embed_t_ref[...], onehot, preferred_element_type=jnp.float32
    ).astype(out_ref.dtype)


def point_embedding(points, nodes, embed_table, num_valid_nodes=None,
                    tile_n=2048, vmem_cap_bytes=24 * 1024 * 1024):
    """points: (..., 2) ; nodes: (max_len, 2) ; embed_table: (max_len, E).

    num_valid_nodes: the module's HWM.  If given as a static Python int the
    node/embedding tables are sliced to round_up(HWM, 128) (big perf win);
    rows >= HWM never match in either case.
    """
    orig_shape = points.shape
    assert orig_shape[-1] == 2
    n = int(np.prod(orig_shape[:-1]))
    m0, e = embed_table.shape
    assert nodes.shape == (m0, 2)

    int_min = jnp.iinfo(jnp.int32).min
    int_max = jnp.iinfo(jnp.int32).max

    def to_key(xy):
        # torch .round(decimals=4), mapped to the exact scaled-integer domain.
        return jnp.round(xy.astype(jnp.float32) * 1e4).astype(jnp.int32)

    # --- nodes: HWM-aware slice + identical key transform, pad M to 128 -----
    hwm_static = (num_valid_nodes is not None
                  and isinstance(num_valid_nodes, (int, np.integer)))
    if hwm_static:
        m_keep = min(m0, _round_up(max(int(num_valid_nodes), 1), LANE))
    else:
        m_keep = m0
    nkeys = to_key(nodes[:m_keep])                              # (m_keep, 2)
    if num_valid_nodes is not None:
        hwm = int(num_valid_nodes) if hwm_static else num_valid_nodes
        valid = (jnp.arange(m_keep) < hwm)[:, None]
        nkeys = jnp.where(valid, nkeys, int_max)                # never matches
    m = _round_up(m_keep, LANE)                                 # pad to 128, not 256
    nkeys_p = jnp.full((m, 2), int_max, dtype=jnp.int32)        # pad never matches
    nkeys_p = nkeys_p.at[:m_keep, :].set(nkeys)

    # --- embedding table, transposed so the big N axis is lane-dense out ----
    embed_t = jnp.zeros((e, m), dtype=jnp.float32)
    embed_t = embed_t.at[:, :m_keep].set(
        embed_table[:m_keep].astype(jnp.float32).T)

    # --- tile-size selection -------------------------------------------------
    tile_n = _round_up(max(int(tile_n), LANE), LANE)
    n128 = _round_up(max(n, 1), LANE)
    # Grid steps: cover N, and use >=2 steps whenever possible so the
    # "parallel" N axis feeds both TensorCores on v7x (no-op on v5e/v6e).
    g = pl.cdiv(n128, tile_n)
    if n128 >= 2 * LANE:
        g = max(g, 2)
    # Adaptive tile: keeps tail padding within ~one lane-group per step.
    tn = _round_up(pl.cdiv(n128, g), LANE)
    # VMEM ceiling guard (v7x: 64 MiB physical / 32 MiB scoped default).
    while tn > LANE and _tile_vmem_bytes(tn, m, e) > vmem_cap_bytes:
        tn = _round_up(tn // 2, LANE)
    g = pl.cdiv(n128, tn)
    n_pad = g * tn

    # --- points: keys, transpose to (2, N_pad), pad never matches -----------
    pkeys = to_key(points.reshape(n, 2))                        # (N, 2)
    pkeys_t = jnp.full((2, n_pad), int_min, dtype=jnp.int32)
    pkeys_t = pkeys_t.at[:, :n].set(pkeys.T)

    cost = pl.CostEstimate(
        flops=2 * n_pad * m * e,
        transcendentals=0,
        bytes_accessed=2 * n_pad * 4 + m * 2 * 4 + e * m * 4 + e * n_pad * 4,
    )

    out_t = pl.pallas_call(
        point_embed_kernel,
        out_shape=jax.ShapeDtypeStruct((e, n_pad), jnp.float32),
        grid=(g,),
        in_specs=[
            pl.BlockSpec((2, tn), lambda i: (0, i)),   # point keys, pipelined
            pl.BlockSpec((m, 2), lambda i: (0, 0)),    # node keys, VMEM-resident
            pl.BlockSpec((e, m), lambda i: (0, 0)),    # embed^T,   VMEM-resident
        ],
        out_specs=pl.BlockSpec((e, tn), lambda i: (0, i)),
        compiler_params=pltpu.CompilerParams(
            dimension_semantics=("parallel",),         # shard N across v7x's 2 TCs
        ),
        cost_estimate=cost,
    )(pkeys_t, nkeys_p, embed_t)

    out = out_t[:, :n].T                               # layout plumbing (see TODO)
    return out.reshape(orig_shape[:-1] + (e,))


if __name__ == "__main__":
    key = jax.random.PRNGKey(0)
    k_pts, k_emb, k_pts2 = jax.random.split(key, 3)

    # Module-consistent small sizes (module default max_len=200).
    MAX_LEN = 200
    EMBED_SIZE = 32
    BATCH, SEQ = 2, 8       # points shape (2, 8, 2) -> N = 16 flattened points

    # Query points: small integer-valued 2D coordinates (exact after rounding).
    points = jax.random.randint(k_pts, (BATCH, SEQ, 2), 0, 5).astype(jnp.float32)

    # Pre-populated node table: all 5x5 grid points registered, rest stay -1
    # (matching the module's "-ones" initialization for unused slots).
    gx, gy = jnp.meshgrid(jnp.arange(5.0), jnp.arange(5.0), indexing="ij")
    grid_nodes = jnp.stack([gx.ravel(), gy.ravel()], axis=-1)          # (25, 2)
    hwm = int(grid_nodes.shape[0])
    nodes = jnp.full((MAX_LEN, 2), -1.0, dtype=jnp.float32)
    nodes = nodes.at[:hwm].set(grid_nodes)

    # Deterministic embedding weight (nn.Embedding default init: N(0, 1)).
    embed_table = jax.random.normal(k_emb, (MAX_LEN, EMBED_SIZE), dtype=jnp.float32)

    # Plain-JAX reference of the same forward pass.
    def reference(pts):
        pts_flat = jnp.round(pts.reshape(-1, 2) * 1e4) * 1e-4
        nodes_r = jnp.round(nodes * 1e4) * 1e-4
        choice = jnp.all(pts_flat[:, None, :] == nodes_r[None, :, :], axis=-1)
        idx = jnp.argmax(choice, axis=-1)
        return embed_table[idx].reshape(pts.shape[:-1] + (EMBED_SIZE,))

    out = point_embedding(points, nodes, embed_table, num_valid_nodes=hwm)
    out = jax.block_until_ready(out)
    assert out.shape == (BATCH, SEQ, EMBED_SIZE), out.shape
    np.testing.assert_allclose(np.asarray(out), np.asarray(reference(points)),
                               rtol=1e-6, atol=1e-6)

    # Additional check: larger N exercises the multi-tile / >=2 grid-step path
    # (and the never-matching tail padding).
    points2 = jax.random.randint(k_pts2, (3, 100, 2), 0, 5).astype(jnp.float32)
    out2 = jax.block_until_ready(
        point_embedding(points2, nodes, embed_table, num_valid_nodes=hwm))
    assert out2.shape == (3, 100, EMBED_SIZE), out2.shape
    np.testing.assert_allclose(np.asarray(out2), np.asarray(reference(points2)),
                               rtol=1e-6, atol=1e-6)

    print("KERNEL_OK")
</pallas_src>

<mosaic_0001>
module attributes {stable_mosaic.version = 11 : i64} {
  func.func @point_embed_kernel(%arg0: i32, %arg1: memref<2x128xi32, #tpu.memory_space<vmem>>, %arg2: memref<128x2xi32, #tpu.memory_space<vmem>>, %arg3: memref<32x128xf32, #tpu.memory_space<vmem>>, %arg4: memref<32x128xf32, #tpu.memory_space<vmem>>) attributes {dimension_semantics = [#tpu.dimension_semantics<parallel>], iteration_bounds = array<i64: 1>, scalar_prefetch = 0 : i64, scratch_operands = 0 : i64, tpu.core_type = #tpu.core_type<tc>, window_params = [{transform_indices = @transform_0, window_bounds = array<i64: 2, 128>}, {pipeline_mode = #tpu.pipeline_mode<synchronous>, transform_indices = @transform_1, window_bounds = array<i64: 128, 2>}, {pipeline_mode = #tpu.pipeline_mode<synchronous>, transform_indices = @transform_2, window_bounds = array<i64: 32, 128>}, {transform_indices = @transform_3, window_bounds = array<i64: 32, 128>}]} {
    %c0 = arith.constant 0 : index
    %c0_0 = arith.constant 0 : index
    %0 = vector.load %arg1[%c0, %c0_0] : memref<2x128xi32, #tpu.memory_space<vmem>>, vector<1x128xi32>
    %c1 = arith.constant 1 : index
    %c0_1 = arith.constant 0 : index
    %1 = vector.load %arg1[%c1, %c0_1] : memref<2x128xi32, #tpu.memory_space<vmem>>, vector<1x128xi32>
    %c0_2 = arith.constant 0 : index
    %c0_3 = arith.constant 0 : index
    %2 = vector.load %arg2[%c0_2, %c0_3] : memref<128x2xi32, #tpu.memory_space<vmem>>, vector<128x1xi32>
    %c0_4 = arith.constant 0 : index
    %c1_5 = arith.constant 1 : index
    %3 = vector.load %arg2[%c0_4, %c1_5] : memref<128x2xi32, #tpu.memory_space<vmem>>, vector<128x1xi32>
    %4 = vector.broadcast %2 : vector<128x1xi32> to vector<128x128xi32>
    %5 = vector.broadcast %0 : vector<1x128xi32> to vector<128x128xi32>
    %6 = arith.cmpi eq, %4, %5 : vector<128x128xi32>
    %7 = vector.broadcast %3 : vector<128x1xi32> to vector<128x128xi32>
    %8 = vector.broadcast %1 : vector<1x128xi32> to vector<128x128xi32>
    %9 = arith.cmpi eq, %7, %8 : vector<128x128xi32>
    %10 = arith.andi %6, %9 : vector<128x128xi1>
    %11 = arith.extui %10 : vector<128x128xi1> to vector<128x128xi32>
    %12 = arith.sitofp %11 : vector<128x128xi32> to vector<128x128xf32>
    %c0_6 = arith.constant 0 : index
    %c0_7 = arith.constant 0 : index
    %13 = vector.load %arg3[%c0_6, %c0_7] : memref<32x128xf32, #tpu.memory_space<vmem>>, vector<32x128xf32>
    %cst = arith.constant dense<0.000000e+00> : vector<32x128xf32>
    %14 = tpu.matmul %13, %12, %cst {dimension_numbers = #tpu.dot_dimension_numbers<[1], [0], [0], [1], [0, 0, 1, 1], [], []>} : vector<32x128xf32>, vector<128x128xf32>, vector<32x128xf32> -> vector<32x128xf32>
    %c0_8 = arith.constant 0 : index
    %c0_9 = arith.constant 0 : index
    %15 = vector.load %arg4[%c0_8, %c0_9] : memref<32x128xf32, #tpu.memory_space<vmem>>, vector<32x128xf32>
    tpu.vector_store %arg4[%c0_8, %c0_9], %14 {strides = array<i32>} : memref<32x128xf32, #tpu.memory_space<vmem>>, vector<32x128xf32>,
    return
  }
  func.func @transform_0(%arg0: i32) -> (i32, i32) {
    %c0_i32 = arith.constant 0 : i32
    %c0_i32_0 = arith.constant 0 : i32
    return %c0_i32, %arg0 : i32, i32
  }
  func.func @transform_1(%arg0: i32) -> (i32, i32) {
    %c0_i32 = arith.constant 0 : i32
    %c0_i32_0 = arith.constant 0 : i32
    %c0_i32_1 = arith.constant 0 : i32
    return %c0_i32, %c0_i32_0 : i32, i32
  }
  func.func @transform_2(%arg0: i32) -> (i32, i32) {
    %c0_i32 = arith.constant 0 : i32
    %c0_i32_0 = arith.constant 0 : i32
    %c0_i32_1 = arith.constant 0 : i32
    return %c0_i32, %c0_i32_0 : i32, i32
  }
  func.func @transform_3(%arg0: i32) -> (i32, i32) {
    %c0_i32 = arith.constant 0 : i32
    %c0_i32_0 = arith.constant 0 : i32
    return %c0_i32, %arg0 : i32, i32
  }
}

</mosaic_0001>

<llo_original>
// kernel: tpu_custom_call.1
$region0: #{tpu_custom_call.1}
  #allocation0 [shape = 'u32[]', space=smem, size = 0x4, offset = 0x4, fixed_abs, tag = 'smem constant byte address 0x4 - core index']
  #allocation1 [shape = 'u32[144,128]{1,0:T(1,128)}', space=vmem, size = 0x12000, scoped, tag = 'internal scratch']
  %s0 = inlined_call_operand.vmem [shape: s32[2,128], index: 0, kind: input, shape index: {}]
  %s1 = inlined_call_operand.vmem [shape: s32[128,2], index: 1, kind: input, shape index: {}]
  %s2 = inlined_call_operand.vmem [shape: f32[32,128], index: 2, kind: input, shape index: {}]
  %s3 = inlined_call_operand.hbm [shape: f32[32,128], index: 3, kind: output, shape index: {}]
  %s4 = sld [smem:[#allocation0]]
  $region22: #{tpu_custom_call.1} parent=0
    _
  %s6 = ssub.s32 1, %s4
  %s7 = scalar_select 0, %s6, %s4
  $region1: #{tpu_custom_call.1} parent=0
    #allocation2 [shape = 'u8[16384]{0}', space=vmem, size = 0x4000, scoped, tag = 'output window, operand 0, single buffered']
    #allocation3 [shape = 's32[1]{0}', space=sflag, size = 0x4, scoped, tag = 'scoped memory for tpu_custom_call.1']
    %8 = vsyncpa [#allocation3], 0
    // Predicated region
    $region2: #{tpu_custom_call.1} parent=1 // pred_check
      _
    $region3: #{tpu_custom_call.1} parent=1 // pred_check_branch
      %10 = sbr.rel (0) target = $region5
    $region4: #{tpu_custom_call.1} parent=1 // pred_region
      _
    $region5: #{tpu_custom_call.1} parent=1 // pred_fallthru
      _
    // Predicated region
    $region6: #{tpu_custom_call.1} parent=1 // pred_check
      _
    $region7: #{tpu_custom_call.1} parent=1 // pred_check_branch
      %12 = sbr.rel (0) target = $region9
    $region8: #{tpu_custom_call.1} parent=1 // pred_region
      _
    $region9: #{tpu_custom_call.1} parent=1 // pred_fallthru
      _
    // Predicated region
    $region10: #{tpu_custom_call.1} parent=1 // pred_check
      _
    $region11: #{tpu_custom_call.1} parent=1 // pred_check_branch
      %14 = sbr.rel (0) target = $region13
    $region12: #{tpu_custom_call.1} parent=1 // pred_region
      _
    $region13: #{tpu_custom_call.1} parent=1 // pred_fallthru
      _
    %v15 = vld [vmem:[%s0] sm:$0x1]
    %v16 = vld [vmem:[%s0 + $0x1] sm:$0x1]
    %v17 = vld [vmem:[%s1] sm:$0xff]
    %v18 = vld [vmem:[%s1 + $0x8] sm:$0xff]
    %v19 = vld [vmem:[%s1 + $0x10] sm:$0xff]
    %v20 = vld [vmem:[%s1 + $0x18] sm:$0xff]
    %v21 = vld [vmem:[%s1 + $0x20] sm:$0xff]
    %v22 = vld [vmem:[%s1 + $0x28] sm:$0xff]
    %v23 = vld [vmem:[%s1 + $0x30] sm:$0xff]
    %v24 = vld [vmem:[%s1 + $0x38] sm:$0xff]
    %v25 = vld [vmem:[%s1 + $0x40] sm:$0xff]
    %v26 = vld [vmem:[%s1 + $0x48] sm:$0xff]
    %v27 = vld [vmem:[%s1 + $0x50] sm:$0xff]
    %v28 = vld [vmem:[%s1 + $0x58] sm:$0xff]
    %v29 = vld [vmem:[%s1 + $0x60] sm:$0xff]
    %v30 = vld [vmem:[%s1 + $0x68] sm:$0xff]
    %v31 = vld [vmem:[%s1 + $0x70] sm:$0xff]
    %v32 = vld [vmem:[%s1 + $0x78] sm:$0xff]
    %33 = vset.pattern.permute.xlu0 0
    %34 = vperm.xlu0 %33, %v17
    %v35 = vpop.permute.xlu0 %34
    %36 = vset.pattern.permute.xlu0 0
    %37 = vperm.xlu0 %36, %v18
    %v38 = vpop.permute.xlu0 %37
    %39 = vset.pattern.permute.xlu0 0
    %40 = vperm.xlu0 %39, %v19
    %v41 = vpop.permute.xlu0 %40
    %42 = vset.pattern.permute.xlu0 0
    %43 = vperm.xlu0 %42, %v20
    %v44 = vpop.permute.xlu0 %43
    %45 = vset.pattern.permute.xlu0 0
    %46 = vperm.xlu0 %45, %v21
    %v47 = vpop.permute.xlu0 %46
    %48 = vset.pattern.permute.xlu0 0
    %49 = vperm.xlu0 %48, %v22
    %v50 = vpop.permute.xlu0 %49
    %51 = vset.pattern.permute.xlu0 0
    %52 = vperm.xlu0 %51, %v23
    %v53 = vpop.permute.xlu0 %52
    %54 = vset.pattern.permute.xlu0 0
    %55 = vperm.xlu0 %54, %v24
    %v56 = vpop.permute.xlu0 %55
    %57 = vset.pattern.permute.xlu0 0
    %58 = vperm.xlu0 %57, %v25
    %v59 = vpop.permute.xlu0 %58
    %60 = vset.pattern.permute.xlu0 0
    %61 = vperm.xlu0 %60, %v26
    %v62 = vpop.permute.xlu0 %61
    %63 = vset.pattern.permute.xlu0 0
    %64 = vperm.xlu0 %63, %v27
    %v65 = vpop.permute.xlu0 %64
    %66 = vset.pattern.permute.xlu0 0
    %67 = vperm.xlu0 %66, %v28
    %v68 = vpop.permute.xlu0 %67
    %69 = vset.pattern.permute.xlu0 0
    %70 = vperm.xlu0 %69, %v29
    %v71 = vpop.permute.xlu0 %70
    %72 = vset.pattern.permute.xlu0 0
    %73 = vperm.xlu0 %72, %v30
    %v74 = vpop.permute.xlu0 %73
    %75 = vset.pattern.permute.xlu0 0
    %76 = vperm.xlu0 %75, %v31
    %v77 = vpop.permute.xlu0 %76
    %78 = vset.pattern.permute.xlu0 0
    %79 = vperm.xlu0 %78, %v32
    %v80 = vpop.permute.xlu0 %79
    %v81 = vlaneseq
    %v82 = vshrl.u32 %v81, 7
    %v83 = vsub.s32 0, %v82
    %v84 = vrot.slane %v15, %v83
    %vm85 = vcmp.eq.s32.totalorder %v35, %v84
    %vm86 = vcmp.eq.s32.totalorder %v38, %v84
    %vm87 = vcmp.eq.s32.totalorder %v41, %v84
    %vm88 = vcmp.eq.s32.totalorder %v44, %v84
    %vm89 = vcmp.eq.s32.totalorder %v47, %v84
    %vm90 = vcmp.eq.s32.totalorder %v50, %v84
    %vm91 = vcmp.eq.s32.totalorder %v53, %v84
    %vm92 = vcmp.eq.s32.totalorder %v56, %v84
    %vm93 = vcmp.eq.s32.totalorder %v59, %v84
    %vm94 = vcmp.eq.s32.totalorder %v62, %v84
    %vm95 = vcmp.eq.s32.totalorder %v65, %v84
    %vm96 = vcmp.eq.s32.totalorder %v68, %v84
    %vm97 = vcmp.eq.s32.totalorder %v71, %v84
    %vm98 = vcmp.eq.s32.totalorder %v74, %v84
    %vm99 = vcmp.eq.s32.totalorder %v77, %v84
    %vm100 = vcmp.eq.s32.totalorder %v80, %v84
    %101 = vset.pattern.permute.xlu0 1
    %102 = vperm.xlu0 %101, %v17
    %v103 = vpop.permute.xlu0 %102
    %104 = vset.pattern.permute.xlu0 1
    %105 = vperm.xlu0 %104, %v18
    %v106 = vpop.permute.xlu0 %105
    %107 = vset.pattern.permute.xlu0 1
    %108 = vperm.xlu0 %107, %v19
    %v109 = vpop.permute.xlu0 %108
    %110 = vset.pattern.permute.xlu0 1
    %111 = vperm.xlu0 %110, %v20
    %v112 = vpop.permute.xlu0 %111
    %113 = vset.pattern.permute.xlu0 1
    %114 = vperm.xlu0 %113, %v21
    %v115 = vpop.permute.xlu0 %114
    %116 = vset.pattern.permute.xlu0 1
    %117 = vperm.xlu0 %116, %v22
    %v118 = vpop.permute.xlu0 %117
    %119 = vset.pattern.permute.xlu0 1
    %120 = vperm.xlu0 %119, %v23
    %v121 = vpop.permute.xlu0 %120
    %122 = vset.pattern.permute.xlu0 1
    %123 = vperm.xlu0 %122, %v24
    %v124 = vpop.permute.xlu0 %123
    %125 = vset.pattern.permute.xlu0 1
    %126 = vperm.xlu0 %125, %v25
    %v127 = vpop.permute.xlu0 %126
    %128 = vset.pattern.permute.xlu0 1
    %129 = vperm.xlu0 %128, %v26
    %v130 = vpop.permute.xlu0 %129
    %131 = vset.pattern.permute.xlu0 1
    %132 = vperm.xlu0 %131, %v27
    %v133 = vpop.permute.xlu0 %132
    %134 = vset.pattern.permute.xlu0 1
    %135 = vperm.xlu0 %134, %v28
    %v136 = vpop.permute.xlu0 %135
    %137 = vset.pattern.permute.xlu0 1
    %138 = vperm.xlu0 %137, %v29
    %v139 = vpop.permute.xlu0 %138
    %140 = vset.pattern.permute.xlu0 1
    %141 = vperm.xlu0 %140, %v30
    %v142 = vpop.permute.xlu0 %141
    %143 = vset.pattern.permute.xlu0 1
    %144 = vperm.xlu0 %143, %v31
    %v145 = vpop.permute.xlu0 %144
    %146 = vset.pattern.permute.xlu0 1
    %147 = vperm.xlu0 %146, %v32
    %v148 = vpop.permute.xlu0 %147
    %v149 = vlaneseq
    %v150 = vshrl.u32 %v149, 7
    %v151 = vsub.s32 0, %v150
    %v152 = vrot.slane %v16, %v151
    %vm153 = vcmp.eq.s32.totalorder %v103, %v152
    %vm154 = vcmp.eq.s32.totalorder %v106, %v152
    %vm155 = vcmp.eq.s32.totalorder %v109, %v152
    %vm156 = vcmp.eq.s32.totalorder %v112, %v152
    %vm157 = vcmp.eq.s32.totalorder %v115, %v152
    %vm158 = vcmp.eq.s32.totalorder %v118, %v152
    %vm159 = vcmp.eq.s32.totalorder %v121, %v152
    %vm160 = vcmp.eq.s32.totalorder %v124, %v152
    %vm161 = vcmp.eq.s32.totalorder %v127, %v152
    %vm162 = vcmp.eq.s32.totalorder %v130, %v152
    %vm163 = vcmp.eq.s32.totalorder %v133, %v152
    %vm164 = vcmp.eq.s32.totalorder %v136, %v152
    %vm165 = vcmp.eq.s32.totalorder %v139, %v152
    %vm166 = vcmp.eq.s32.totalorder %v142, %v152
    %vm167 = vcmp.eq.s32.totalorder %v145, %v152
    %vm168 = vcmp.eq.s32.totalorder %v148, %v152
    %vm169 = vmand %vm85, %vm153
    %vm170 = vmand %vm86, %vm154
    %vm171 = vmand %vm87, %vm155
    %vm172 = vmand %vm88, %vm156
    %vm173 = vmand %vm89, %vm157
    %vm174 = vmand %vm90, %vm158
    %vm175 = vmand %vm91, %vm159
    %vm176 = vmand %vm92, %vm160
    %vm177 = vmand %vm93, %vm161
    %vm178 = vmand %vm94, %vm162
    %vm179 = vmand %vm95, %vm163
    %vm180 = vmand %vm96, %vm164
    %vm181 = vmand %vm97, %vm165
    %vm182 = vmand %vm98, %vm166
    %vm183 = vmand %vm99, %vm167
    %vm184 = vmand %vm100, %vm168
    %v185 = vsel %vm169, 1, 0
    %v186 = vsel %vm170, 1, 0
    %v187 = vsel %vm171, 1, 0
    %v188 = vsel %vm172, 1, 0
    %v189 = vsel %vm173, 1, 0
    %v190 = vsel %vm174, 1, 0
    %v191 = vsel %vm175, 1, 0
    %v192 = vsel %vm176, 1, 0
    %v193 = vsel %vm177, 1, 0
    %v194 = vsel %vm178, 1, 0
    %v195 = vsel %vm179, 1, 0
    %v196 = vsel %vm180, 1, 0
    %v197 = vsel %vm181, 1, 0
    %v198 = vsel %vm182, 1, 0
    %v199 = vsel %vm183, 1, 0
    %v200 = vsel %vm184, 1, 0
    %v201 = vcvt.s32.f32 %v185
    %v202 = vcvt.s32.f32 %v186
    %v203 = vcvt.s32.f32 %v187
    %v204 = vcvt.s32.f32 %v188
    %v205 = vcvt.s32.f32 %v189
    %v206 = vcvt.s32.f32 %v190
    %v207 = vcvt.s32.f32 %v191
    %v208 = vcvt.s32.f32 %v192
    %v209 = vcvt.s32.f32 %v193
    %v210 = vcvt.s32.f32 %v194
    %v211 = vcvt.s32.f32 %v195
    %v212 = vcvt.s32.f32 %v196
    %v213 = vcvt.s32.f32 %v197
    %v214 = vcvt.s32.f32 %v198
    %v215 = vcvt.s32.f32 %v199
    %v216 = vcvt.s32.f32 %v200
    %v217 = vld [vmem:[%s2] sm:$0xff]
    %v218 = vld [vmem:[%s2 + $0x8] sm:$0xff]
    %v219 = vld [vmem:[%s2 + $0x10] sm:$0xff]
    %v220 = vld [vmem:[%s2 + $0x18] sm:$0xff]
    %221 = vmatprep.subr.mxu0 0.0
    %222 = vmatpush1.msra.mxu0 %v201
    %223 = vmatprep.subr.mxu0 0.0
    %224 = vmatpush1.msra.mxu0 %v202
    %225 = vmatprep.subr.mxu0 0.0
    %226 = vmatpush1.msra.mxu0 %v203
    %227 = vmatprep.subr.mxu0 0.0
    %228 = vmatpush1.msra.mxu0 %v204
    %229 = vmatprep.subr.mxu0 0.0
    %230 = vmatpush1.msra.mxu0 %v205
    %231 = vmatprep.subr.mxu0 0.0
    %232 = vmatpush1.msra.mxu0 %v206
    %233 = vmatprep.subr.mxu0 0.0
    %234 = vmatpush1.msra.mxu0 %v207
    %235 = vmatprep.subr.mxu0 0.0
    %236 = vmatpush1.msra.mxu0 %v208
    %237 = vmatprep.subr.mxu0 0.0
    %238 = vmatpush1.msra.mxu0 %v209
    %239 = vmatprep.subr.mxu0 0.0
    %240 = vmatpush1.msra.mxu0 %v210
    %241 = vmatprep.subr.mxu0 0.0
    %242 = vmatpush1.msra.mxu0 %v211
    %243 = vmatprep.subr.mxu0 0.0
    %244 = vmatpush1.msra.mxu0 %v212
    %245 = vmatprep.subr.mxu0 0.0
    %246 = vmatpush1.msra.mxu0 %v213
    %247 = vmatprep.subr.mxu0 0.0
    %248 = vmatpush1.msra.mxu0 %v214
    %249 = vmatprep.subr.mxu0 0.0
    %250 = vmatpush1.msra.mxu0 %v215
    %251 = vmatprep.subr.mxu0 0.0
    %252 = vmatpush1.msra.mxu0 %v216
    %253 = vmatprep.subr.mxu0 0.0
    %254 = vmatpush1.msra.mxu0 0.0
    %255 = vmatprep.subr.mxu0 0.0
    %256 = vmatpush1.msra.mxu0 0.0
    %257 = vmatprep.subr.mxu0 0.0
    %258 = vmatpush1.msra.mxu0 0.0
    %259 = vmatprep.subr.mxu0 0.0
    %260 = vmatpush1.msra.mxu0 0.0
    %261 = vmatprep.subr.mxu0 0.0
    %262 = vmatpush1.msra.mxu0 0.0
    %263 = vmatprep.subr.mxu0 0.0
    %264 = vmatpush1.msra.mxu0 0.0
    %265 = vmatprep.subr.mxu0 0.0
    %266 = vmatpush1.msra.mxu0 0.0
    %267 = vmatprep.subr.mxu0 0.0
    %268 = vmatpush1.msra.mxu0 0.0
    %269 = vmatprep.subr.mxu0 0.0
    %270 = vmatpush1.msra.mxu0 0.0
    %271 = vmatprep.subr.mxu0 0.0
    %272 = vmatpush1.msra.mxu0 0.0
    %273 = vmatprep.subr.mxu0 0.0
    %274 = vmatpush1.msra.mxu0 0.0
    %275 = vmatprep.subr.mxu0 0.0
    %276 = vmatpush1.msra.mxu0 0.0
    %277 = vmatprep.subr.mxu0 0.0
    %278 = vmatpush1.msra.mxu0 0.0
    %279 = vmatprep.subr.mxu0 0.0
    %280 = vmatpush1.msra.mxu0 0.0
    %281 = vmatprep.subr.mxu0 0.0
    %282 = vmatpush1.msra.mxu0 0.0
    %283 = vmatprep.subr.mxu0 0.0
    %284 = vmatpush1.msra.mxu0 0.0
    %285 = vmatprep.mubr.f32.mxu0 0.0
    %286 = vmatmul.mubr.f32.gmra.mrb[0].mxu0 %v217
    %v287 = vpop.f32.mrb[0].mxu0
    %v288 = vadd.f32 0.0, %v287
    %v289 = vpop.f32.mrb[0].mxu0
    %290 = vmatprep.mubr.f32.mxu0 0.0
    %291 = vmatmul.mubr.f32.gmra.mrb[0].mxu0 %v218
    %v292 = vpop.f32.mrb[0].mxu0
    %v293 = vadd.f32 0.0, %v292
    %v294 = vpop.f32.mrb[0].mxu0
    %295 = vmatprep.mubr.f32.mxu0 0.0
    %296 = vmatmul.mubr.f32.gmra.mrb[0].mxu0 %v219
    %v297 = vpop.f32.mrb[0].mxu0
    %v298 = vadd.f32 0.0, %v297
    %v299 = vpop.f32.mrb[0].mxu0
    %300 = vmatprep.mubr.f32.mxu0 0.0
    %301 = vmatmul.mubr.f32.gmra.mrb[0].mxu0 %v220
    %v302 = vpop.f32.mrb[0].mxu0
    %v303 = vadd.f32 0.0, %v302
    %v304 = vpop.f32.mrb[0].mxu0
    %305 = vdwg.mxu0
    %306 = vst [vmem:[#allocation2] sm:$0xff] %v288
    %307 = vst [vmem:[#allocation2 + $0x8] sm:$0xff] %v293
    %308 = vst [vmem:[#allocation2 + $0x10] sm:$0xff] %v298
    %309 = vst [vmem:[#allocation2 + $0x18] sm:$0xff] %v303
    // Predicated region
    $region14: #{tpu_custom_call.1} parent=1 // pred_check
      _
    $region15: #{tpu_custom_call.1} parent=1 // pred_check_branch
      %311 = sbr.rel (0) target = $region17
    $region16: #{tpu_custom_call.1} parent=1 // pred_region
      %s313 = ssub.s32 512, 512
      %314 = vsyncadd [#allocation3], %s313
      %s315 = sshll.u32 [#allocation2], 4
      %s316 = int_to_ptr.vmem [resolvable:$true] %s315
      %321 = dma.vmem_to_hbm [thread:$0]  %s316, 512, %s3, [#allocation3], 128, 128, 8
    $region17: #{tpu_custom_call.1} parent=1 // pred_fallthru
      _
    // Predicated region
    $region18: #{tpu_custom_call.1} parent=1 // pred_check
      _
    $region19: #{tpu_custom_call.1} parent=1 // pred_check_branch
      %323 = sbr.rel (0) target = $region21
    $region20: #{tpu_custom_call.1} parent=1 // pred_region
      %324 = dma.done [#allocation3], 512
    $region21: #{tpu_custom_call.1} parent=1 // pred_fallthru
      _
    %325 = vsyncpa [#allocation3], 1

</llo_original>
